<compile_context>
chip_gen: v7x
topology: tpu7x:2x2x1
jax: 0.10.0
libtpu: 0.0.40
codegen_flags: <defaults>
</compile_context>

<pallas_src>
import functools

import jax
import jax.numpy as jnp
from jax.experimental import pallas as pl
from jax.experimental.pallas import tpu as pltpu


# ---------------------------------------------------------------------------
# Spectral norm (converged power iteration on W reshaped to (Cout, Cin*kh*kw)).
# PyTorch's spectral_norm does 1 power-iteration step per forward from a random
# u; here we use the deterministic fixed point (what it converges to).
# ---------------------------------------------------------------------------
def spectral_normalize(w, n_iters=50, eps=1e-12):
    c_out = w.shape[0]
    w2d = w.reshape(c_out, -1).astype(jnp.float32)
    u = jnp.ones((c_out,), jnp.float32) / jnp.sqrt(jnp.float32(c_out))
    v = jnp.zeros((w2d.shape[1],), jnp.float32)
    for _ in range(n_iters):
        v = w2d.T @ u
        v = v / (jnp.linalg.norm(v) + eps)
        u = w2d @ v
        u = u / (jnp.linalg.norm(u) + eps)
    sigma = u @ (w2d @ v)
    return (w.astype(jnp.float32) / sigma).astype(w.dtype)


# ---------------------------------------------------------------------------
# im2col for k=4, s=2, reflect pad 1 (pure layout, done once in the wrapper).
# patches[n, ci*16 + p*4 + q, i*Wo + j] = xpad[n, ci, 2i+p, 2j+q]
# ---------------------------------------------------------------------------
def extract_patches(x):
    n, c, h, w = x.shape
    ho, wo = (h + 2 - 4) // 2 + 1, (w + 2 - 4) // 2 + 1
    xp = jnp.pad(x, ((0, 0), (0, 0), (1, 1), (1, 1)), mode="reflect")
    slabs = []
    for p in range(4):
        for q in range(4):
            slabs.append(
                jax.lax.slice(
                    xp,
                    (0, 0, p, q),
                    (n, c, p + 2 * (ho - 1) + 1, q + 2 * (wo - 1) + 1),
                    (1, 1, 2, 2),
                )
            )
    pat = jnp.stack(slabs, axis=2)                 # (N, Cin, 16, Ho, Wo)
    return pat.reshape(n, c * 16, ho * wo), ho, wo


# ---------------------------------------------------------------------------
# Pallas kernel: fused (conv-as-matmul) + InstanceNorm2d + ReLU/LeakyReLU
# ---------------------------------------------------------------------------
def block_fwd_kernel(w_ref, p_ref, o_ref, *, negative_slope, eps):
    # w_ref: (tco, K)      spectral-normalized conv weight, flattened (ci, p, q)
    # p_ref: (1, K, HW)    im2col patches for one batch element
    # o_ref: (1, tco, HW)  normalized + activated output
    w = w_ref[...].astype(jnp.float32)
    patches = p_ref[0].astype(jnp.float32)

    # Convolution: (tco, K) @ (K, HW) -> (tco, HW), f32 accumulation on the MXU.
    y = jnp.dot(w, patches,
                preferred_element_type=jnp.float32,
                precision=jax.lax.Precision.HIGHEST)

    # InstanceNorm2d (affine=False, biased variance, eps=1e-5): per-channel
    # stats over the lane (spatial) axis.
    hw = y.shape[1]
    inv_hw = 1.0 / float(hw)
    mean = jnp.sum(y, axis=1, keepdims=True) * inv_hw
    yc = y - mean
    var = jnp.sum(yc * yc, axis=1, keepdims=True) * inv_hw
    yn = yc * jax.lax.rsqrt(var + eps)

    # Activation: ReLU (negative_slope=0.0) or LeakyReLU(negative_slope).
    out = jnp.where(yn >= 0, yn, negative_slope * yn)
    o_ref[0] = out.astype(o_ref.dtype)


# ---------------------------------------------------------------------------
# Wrapper
# ---------------------------------------------------------------------------
def block_forward(x, weight, *, negative_slope=0.0, eps=1e-5):
    n, c_in, h, w = x.shape
    c_out = weight.shape[0]
    assert weight.shape == (c_out, c_in, 4, 4)
    assert h % 2 == 0 and w % 2 == 0

    w_sn = spectral_normalize(weight)
    wmat = w_sn.reshape(c_out, c_in * 16).astype(jnp.float32)
    patches, ho, wo = extract_patches(x)
    hw = ho * wo
    k = c_in * 16

    # Channel tiling (InstanceNorm is independent per channel). For the demo
    # shapes a single tile covers all channels; for large Cout this bounds the
    # per-step VMEM footprint and keeps both grid axes "parallel" (megacore).
    tco = 128 if (c_out % 128 == 0) else c_out
    n_co = c_out // tco

    kernel = functools.partial(block_fwd_kernel,
                               negative_slope=negative_slope, eps=eps)

    y = pl.pallas_call(
        kernel,
        out_shape=jax.ShapeDtypeStruct((n, c_out, hw), x.dtype),
        grid=(n, n_co),
        in_specs=[
            pl.BlockSpec((tco, k), lambda b, c: (c, 0)),       # conv weight
            pl.BlockSpec((1, k, hw), lambda b, c: (b, 0, 0)),  # im2col patches
        ],
        out_specs=pl.BlockSpec((1, tco, hw), lambda b, c: (b, c, 0)),
        compiler_params=pltpu.CompilerParams(
            dimension_semantics=("parallel", "parallel")),
    )(wmat, patches)

    # Free contiguous view: (N, Cout, Ho*Wo) -> (N, Cout, Ho, Wo).
    return y.reshape(n, c_out, ho, wo)


# ---------------------------------------------------------------------------
# Pure-JAX reference (reflect-pad conv -> InstanceNorm2d -> ReLU)
# ---------------------------------------------------------------------------
def block_reference(x, weight, *, negative_slope=0.0, eps=1e-5):
    w_sn = spectral_normalize(weight).astype(jnp.float32)
    xp = jnp.pad(x, ((0, 0), (0, 0), (1, 1), (1, 1)), mode="reflect")
    y = jax.lax.conv_general_dilated(
        xp.astype(jnp.float32), w_sn,
        window_strides=(2, 2), padding="VALID",
        dimension_numbers=("NCHW", "OIHW", "NCHW"),
        precision=jax.lax.Precision.HIGHEST)
    m = jnp.mean(y, axis=(2, 3), keepdims=True)
    v = jnp.var(y, axis=(2, 3), keepdims=True)
    yn = (y - m) * jax.lax.rsqrt(v + eps)
    return jnp.where(yn >= 0, yn, negative_slope * yn).astype(x.dtype)


# ---------------------------------------------------------------------------
if __name__ == "__main__":
    key = jax.random.PRNGKey(0)
    kx, kw = jax.random.split(key)

    N, C_IN, H, W, C_OUT = 2, 4, 16, 16, 8
    x = jax.random.normal(kx, (N, C_IN, H, W), dtype=jnp.float32)
    weight = 0.1 * jax.random.normal(kw, (C_OUT, C_IN, 4, 4), dtype=jnp.float32)

    out = jax.block_until_ready(block_forward(x, weight))
    ref = block_reference(x, weight)

    assert out.shape == (N, C_OUT, H // 2, W // 2), out.shape
    assert out.dtype == x.dtype
    # Expected ~1e-6 with HIGHEST precision; loose bound only to tolerate MXU
    # precision-mode differences (a wrong kernel errs at O(1) since outputs are
    # unit-variance per channel).
    max_err = float(jnp.max(jnp.abs(out - ref)))
    assert max_err < 1e-2, f"max abs error {max_err}"

    print("KERNEL_OK")
</pallas_src>

<mosaic_0001>
module attributes {stable_mosaic.version = 11 : i64} {
  func.func @block_fwd_kernel(%arg0: i32, %arg1: i32, %arg2: memref<8x64xf32, #tpu.memory_space<vmem>>, %arg3: memref<1x64x64xf32, #tpu.memory_space<vmem>>, %arg4: memref<1x8x64xf32, #tpu.memory_space<vmem>>) attributes {dimension_semantics = [#tpu.dimension_semantics<parallel>, #tpu.dimension_semantics<parallel>], iteration_bounds = array<i64: 2, 1>, scalar_prefetch = 0 : i64, scratch_operands = 0 : i64, tpu.core_type = #tpu.core_type<tc>, window_params = [{transform_indices = @transform_0, window_bounds = array<i64: 8, 64>}, {transform_indices = @transform_1, window_bounds = array<i64: 1, 64, 64>}, {transform_indices = @transform_2, window_bounds = array<i64: 1, 8, 64>}]} {
    %c0 = arith.constant 0 : index
    %c0_0 = arith.constant 0 : index
    %0 = vector.load %arg2[%c0, %c0_0] : memref<8x64xf32, #tpu.memory_space<vmem>>, vector<8x64xf32>
    %c0_1 = arith.constant 0 : index
    %c0_2 = arith.constant 0 : index
    %c0_3 = arith.constant 0 : index
    %1 = vector.load %arg3[%c0_1, %c0_2, %c0_3] : memref<1x64x64xf32, #tpu.memory_space<vmem>>, vector<1x64x64xf32>
    %2 = vector.shape_cast %1 : vector<1x64x64xf32> to vector<64x64xf32>
    %cst = arith.constant dense<0.000000e+00> : vector<8x64xf32>
    %3 = tpu.matmul %0, %2, %cst {dimension_numbers = #tpu.dot_dimension_numbers<[1], [0], [0], [1], [0, 0, 1, 1], [], []>, precision = #tpu.contract_precision<fp32>} : vector<8x64xf32>, vector<64x64xf32>, vector<8x64xf32> -> vector<8x64xf32>
    %cst_4 = arith.constant dense<0.000000e+00> : vector<8xf32>
    %4 = vector.multi_reduction <add>, %3, %cst_4 [1] : vector<8x64xf32> to vector<8xf32>
    %5 = vector.shape_cast %4 : vector<8xf32> to vector<8x1xf32>
    %cst_5 = arith.constant 1.562500e-02 : f32
    %6 = vector.broadcast %cst_5 : f32 to vector<8x1xf32>
    %7 = arith.mulf %5, %6 : vector<8x1xf32>
    %8 = vector.broadcast %7 : vector<8x1xf32> to vector<8x64xf32>
    %9 = arith.subf %3, %8 : vector<8x64xf32>
    %10 = arith.mulf %9, %9 : vector<8x64xf32>
    %cst_6 = arith.constant dense<0.000000e+00> : vector<8xf32>
    %11 = vector.multi_reduction <add>, %10, %cst_6 [1] : vector<8x64xf32> to vector<8xf32>
    %12 = vector.shape_cast %11 : vector<8xf32> to vector<8x1xf32>
    %cst_7 = arith.constant 1.562500e-02 : f32
    %13 = vector.broadcast %cst_7 : f32 to vector<8x1xf32>
    %14 = arith.mulf %12, %13 : vector<8x1xf32>
    %cst_8 = arith.constant 9.99999974E-6 : f32
    %15 = vector.broadcast %cst_8 : f32 to vector<8x1xf32>
    %16 = arith.addf %14, %15 : vector<8x1xf32>
    %17 = math.rsqrt %16 : vector<8x1xf32>
    %18 = vector.broadcast %17 : vector<8x1xf32> to vector<8x64xf32>
    %19 = arith.mulf %9, %18 : vector<8x64xf32>
    %cst_9 = arith.constant 0.000000e+00 : f32
    %20 = vector.broadcast %cst_9 : f32 to vector<8x64xf32>
    %21 = arith.cmpf oge, %19, %20 : vector<8x64xf32>
    %cst_10 = arith.constant 0.000000e+00 : f32
    %22 = vector.broadcast %cst_10 : f32 to vector<8x64xf32>
    %23 = arith.mulf %22, %19 : vector<8x64xf32>
    %24 = arith.select %21, %19, %23 : vector<8x64xi1>, vector<8x64xf32>
    %c0_11 = arith.constant 0 : index
    %c0_12 = arith.constant 0 : index
    %c0_13 = arith.constant 0 : index
    %25 = vector.load %arg4[%c0_11, %c0_12, %c0_13] : memref<1x8x64xf32, #tpu.memory_space<vmem>>, vector<1x8x64xf32>
    %26 = vector.shape_cast %25 : vector<1x8x64xf32> to vector<8x64xf32>
    %27 = vector.shape_cast %24 : vector<8x64xf32> to vector<1x8x64xf32>
    tpu.vector_store %arg4[%c0_11, %c0_12, %c0_13], %27 {strides = array<i32>} : memref<1x8x64xf32, #tpu.memory_space<vmem>>, vector<1x8x64xf32>,
    return
  }
  func.func @transform_0(%arg0: i32, %arg1: i32) -> (i32, i32) {
    %c0_i32 = arith.constant 0 : i32
    %c0_i32_0 = arith.constant 0 : i32
    return %arg1, %c0_i32 : i32, i32
  }
  func.func @transform_1(%arg0: i32, %arg1: i32) -> (i32, i32, i32) {
    %c0_i32 = arith.constant 0 : i32
    %c0_i32_0 = arith.constant 0 : i32
    %c0_i32_1 = arith.constant 0 : i32
    return %arg0, %c0_i32, %c0_i32_0 : i32, i32, i32
  }
  func.func @transform_2(%arg0: i32, %arg1: i32) -> (i32, i32, i32) {
    %c0_i32 = arith.constant 0 : i32
    %c0_i32_0 = arith.constant 0 : i32
    return %arg0, %arg1, %c0_i32 : i32, i32, i32
  }
}

</mosaic_0001>

<llo_original>
// kernel: tpu_custom_call.1
$region0: #{tpu_custom_call.1}
  #allocation0 [shape = 'u32[]', space=smem, size = 0x4, offset = 0x4, fixed_abs, tag = 'smem constant byte address 0x4 - core index']
  #allocation1 [shape = 'u32[144,128]{1,0:T(1,128)}', space=vmem, size = 0x12000, scoped, tag = 'internal scratch']
  %s0 = inlined_call_operand.hbm [shape: f32[8,64], index: 0, kind: input, shape index: {}]
  %s1 = inlined_call_operand.hbm [shape: f32[2,64,64], index: 1, kind: input, shape index: {}]
  %s2 = inlined_call_operand.hbm [shape: f32[2,8,64], index: 2, kind: output, shape index: {}]
  %s3 = sld [smem:[#allocation0]]
  $region49: #{tpu_custom_call.1} parent=0
    _
  %s5 = ssub.s32 1, %s3
  %s6 = scalar_select 0, %s5, %s3
  $region1: #{tpu_custom_call.1} parent=0
    #allocation2 [shape = 'u8[4096]{0}', space=vmem, size = 0x1000, scoped, tag = 'input window, operand 0, single buffered']
    #allocation3 [shape = 's32[2]{0}', space=sflag, size = 0x8, scoped, tag = 'scoped memory for tpu_custom_call.1']
    #allocation4 [shape = 's32[2]{0}', space=sflag, size = 0x8, scoped, tag = 'scoped memory for tpu_custom_call.1']
    #allocation5 [shape = 'u8[65536]{0}', space=vmem, size = 0x10000, scoped, tag = 'input window, operand 1']
    #allocation6 [shape = 's32[2]{0}', space=sflag, size = 0x8, scoped, tag = 'scoped memory for tpu_custom_call.1']
    #allocation7 [shape = 'u8[8192]{0}', space=vmem, size = 0x2000, scoped, tag = 'output window, operand 0']
    %7 = vsyncpa [#allocation3], 0
    %8 = vsyncpa [#allocation6], 0
    %s9 = scalar_lea.sflag [#allocation6], 1
    %10 = vsyncpa %s9, 0
    %11 = vsyncpa [#allocation4], 0
    %s12 = scalar_lea.sflag [#allocation4], 1
    %13 = vsyncpa %s12, 0
    loop: start=0, step=1, limit=4
    $region2: #{tpu_custom_call.1} parent=1 // loop_pre_header
      _
    $region3: #{tpu_custom_call.1} parent=1 // loop_header
      %s15 = sphi 0, %s19
      %p16 = scmp.ge.s32.totalorder %s15, 4
      %s22 = sphi 0, %s34
      %s23 = sphi 0, %s30
      %s24 = sphi 0, %s22
      %s25 = sphi 0, %s23
      %s26 = sphi 0, %s24
      %s27 = sphi 0, %s25
      %s37 = sphi 0, %s39
      %s40 = sphi 0, %s37
      %s41 = sphi 0, %s40
      %s57 = sphi 0, %s41
      %s63 = sphi 0, %s65
      %s66 = sphi 0, %s63
      %s67 = sphi 0, %s66
      %s83 = sphi 0, %s67
      %s91 = sphi 0, %s93
      %s94 = sphi 0, %s91
      %s95 = sphi 0, %s94
      %s111 = sphi 0, %s95
    $region4: #{tpu_custom_call.1} parent=1 // loop_header_branch
      %18 = sbr.rel (%p16) target = $region8
    $region5: #{tpu_custom_call.1} parent=1 // loop_body
      %s20 = ssub.s32 %s15, 1
      %s21 = ssub.s32 %s15, 2
      %s28 = sadd.s32 1, %s23
      %p29 = scmp.ge.s32.totalorder %s28, 1
      %s30 = scalar_select %p29, 0, %s28
      %s31 = sadd.s32 1, %s22
      %s32 = scalar_select %p29, %s31, %s22
      %p33 = scmp.ge.s32.totalorder %s32, 2
      %s34 = scalar_select %p33, 0, %s32
      %s35 = ssub.s32 %s23, %s30
      %p36 = scmp.eq.s32.totalorder %s35, 0
      %s38 = sadd.s32 %s37, 1
      %s39 = scalar_select %p36, %s37, %s38
      %p42 = pneg %p36
      %p43 = scmp.eq.s32.totalorder %s15, 1
      %p44 = por %p42, %p43
      %p45 = scmp.ne.s32.totalorder %s37, %s40
      %p46 = scmp.eq.s32.totalorder %s15, 0
      %p47 = por %p45, %p46
      %p48 = scmp.ne.s32.totalorder %s37, %s40
      %p49 = scmp.eq.s32.totalorder %s20, 1
      %p50 = por %p48, %p49
      %p51 = scmp.ne.s32.totalorder %s40, %s41
      %p52 = scmp.eq.s32.totalorder %s20, 0
      %p53 = por %p51, %p52
      %p54 = scmp.ne.s32.totalorder %s40, %s41
      %p55 = scmp.eq.s32.totalorder %s21, 1
      %p56 = por %p54, %p55
      %p58 = scmp.ne.s32.totalorder %s41, %s57
      %p59 = scmp.eq.s32.totalorder %s21, 0
      %p60 = por %p58, %p59
      %s61 = ssub.s32 %s22, %s34
      %p62 = scmp.eq.s32.totalorder %s61, 0
      %s64 = sadd.s32 %s63, 1
      %s65 = scalar_select %p62, %s63, %s64
      %p68 = pneg %p62
      %p69 = scmp.eq.s32.totalorder %s15, 1
      %p70 = por %p68, %p69
      %p71 = scmp.ne.s32.totalorder %s63, %s66
      %p72 = scmp.eq.s32.totalorder %s15, 0
      %p73 = por %p71, %p72
      %p74 = scmp.ne.s32.totalorder %s63, %s66
      %p75 = scmp.eq.s32.totalorder %s20, 1
      %p76 = por %p74, %p75
      %p77 = scmp.ne.s32.totalorder %s66, %s67
      %p78 = scmp.eq.s32.totalorder %s20, 0
      %p79 = por %p77, %p78
      %p80 = scmp.ne.s32.totalorder %s66, %s67
      %p81 = scmp.eq.s32.totalorder %s21, 1
      %p82 = por %p80, %p81
      %p84 = scmp.ne.s32.totalorder %s67, %s83
      %p85 = scmp.eq.s32.totalorder %s21, 0
      %p86 = por %p84, %p85
      %s87 = ssub.s32 %s22, %s34
      %s88 = ssub.s32 %s23, %s30
      %s89 = sor.u32 %s87, %s88
      %p90 = scmp.eq.s32.totalorder %s89, 0
      %s92 = sadd.s32 %s91, 1
      %s93 = scalar_select %p90, %s91, %s92
      %p96 = pneg %p90
      %p97 = scmp.eq.s32.totalorder %s15, 1
      %p98 = por %p96, %p97
      %p99 = scmp.ne.s32.totalorder %s91, %s94
      %p100 = scmp.eq.s32.totalorder %s15, 0
      %p101 = por %p99, %p100
      %p102 = scmp.ne.s32.totalorder %s91, %s94
      %p103 = scmp.eq.s32.totalorder %s20, 1
      %p104 = por %p102, %p103
      %p105 = scmp.ne.s32.totalorder %s94, %s95
      %p106 = scmp.eq.s32.totalorder %s20, 0
      %p107 = por %p105, %p106
      %p108 = scmp.ne.s32.totalorder %s94, %s95
      %p109 = scmp.eq.s32.totalorder %s21, 1
      %p110 = por %p108, %p109
      %p112 = scmp.ne.s32.totalorder %s95, %s111
      %p113 = scmp.eq.s32.totalorder %s21, 0
      %p114 = por %p112, %p113
      %p115 = scmp.le.s32.totalorder 1, %s15
      %p116 = scmp.lt.s32.totalorder %s15, 3
      %p117 = pnand %p115, %p116
      %p118 = pneg %p117
      // Predicated region
      $region9: #{tpu_custom_call.1} parent=5 // pred_check
        _
      $region10: #{tpu_custom_call.1} parent=5 // pred_check_branch
        %120 = sbr.rel (%p117) target = $region12
      $region11: #{tpu_custom_call.1} parent=5 // pred_region
        %s121 = ssub.s32 %s15, 1
        // Predicated region
        $region13: #{tpu_custom_call.1} parent=11 // pred_check
          %p122 = pneg %p53
        $region14: #{tpu_custom_call.1} parent=11 // pred_check_branch
          %124 = sbr.rel (%p122) target = $region16
        $region15: #{tpu_custom_call.1} parent=11 // pred_region
          %s126 = ssub.s32 128, 128
          %127 = vsyncadd [#allocation3], %s126
          %s128 = smul.addr %s25, 128
          %s129 = scalar_lea.hbm %s0, %s128
          %s131 = sshll.u32 [#allocation2], 4
          %s132 = int_to_ptr.vmem [resolvable:$true] %s131
          %134 = dma.hbm_to_vmem [thread:$0]  %s129, 128, %s132, [#allocation3]
        $region16: #{tpu_custom_call.1} parent=11 // pred_fallthru
          _
      $region12: #{tpu_custom_call.1} parent=5 // pred_fallthru
        _
      %p135 = scmp.lt.s32.totalorder %s15, 2
      // Predicated region
      $region17: #{tpu_custom_call.1} parent=5 // pred_check
        %p136 = pneg %p135
      $region18: #{tpu_custom_call.1} parent=5 // pred_check_branch
        %138 = sbr.rel (%p136) target = $region20
      $region19: #{tpu_custom_call.1} parent=5 // pred_region
        // Predicated region
        $region21: #{tpu_custom_call.1} parent=19 // pred_check
          %p139 = pneg %p73
        $region22: #{tpu_custom_call.1} parent=19 // pred_check_branch
          %141 = sbr.rel (%p139) target = $region24
        $region23: #{tpu_custom_call.1} parent=19 // pred_region
          %s142 = sand.u32 %s63, 1
          %s143 = scalar_lea.sflag [#allocation6], %s142
          %s144 = sand.u32 %s63, 1
          %s145 = smul.addr %s144, 64
          %s146 = scalar_lea.vmem [#allocation5], %s145
          %s148 = ssub.s32 1024, 1024
          %149 = vsyncadd %s143, %s148
          %s150 = smul.addr %s22, 8
          %s151 = smul.addr %s150, 128
          %s152 = scalar_lea.hbm %s1, %s151
          %s153 = sshll.u32 %s146, 4
          %s154 = int_to_ptr.vmem [resolvable:$true] %s153
          %159 = dma.hbm_to_vmem [thread:$0]  %s152, 1024, %s154, %s143, 128, 128, 8
        $region24: #{tpu_custom_call.1} parent=19 // pred_fallthru
          _
      $region20: #{tpu_custom_call.1} parent=5 // pred_fallthru
        _
      %p160 = scmp.le.s32.totalorder 1, %s15
      %p161 = scmp.lt.s32.totalorder %s15, 3
      %p162 = pnand %p160, %p161
      %p163 = pneg %p162
      // Predicated region
      $region25: #{tpu_custom_call.1} parent=5 // pred_check
        _
      $region26: #{tpu_custom_call.1} parent=5 // pred_check_branch
        %165 = sbr.rel (%p162) target = $region28
      $region27: #{tpu_custom_call.1} parent=5 // pred_region
        %s166 = ssub.s32 %s15, 1
        // Predicated region
        $region29: #{tpu_custom_call.1} parent=27 // pred_check
          %p167 = pneg %p53
        $region30: #{tpu_custom_call.1} parent=27 // pred_check_branch
          %169 = sbr.rel (%p167) target = $region32
        $region31: #{tpu_custom_call.1} parent=27 // pred_region
          %170 = dma.done [#allocation3], 128
        $region32: #{tpu_custom_call.1} parent=27 // pred_fallthru
          _
        %s171 = sand.u32 %s66, 1
        %s172 = scalar_lea.sflag [#allocation6], %s171
        %s173 = sand.u32 %s66, 1
        %s174 = smul.addr %s173, 64
        %s175 = scalar_lea.vmem [#allocation5], %s174
        // Predicated region
        $region33: #{tpu_custom_call.1} parent=27 // pred_check
          %p176 = pneg %p79
        $region34: #{tpu_custom_call.1} parent=27 // pred_check_branch
          %178 = sbr.rel (%p176) target = $region36
        $region35: #{tpu_custom_call.1} parent=27 // pred_region
          %179 = dma.done %s172, 1024
        $region36: #{tpu_custom_call.1} parent=27 // pred_fallthru
          _
        %p180 = pneg %p53
        %p181 = pneg %p50
        %s182 = sand.u32 %s66, 1
        %s183 = scalar_lea.sflag [#allocation6], %s182
        %s184 = sand.u32 %s66, 1
        %s185 = smul.addr %s184, 64
        %s186 = scalar_lea.vmem [#allocation5], %s185
        %p187 = pneg %p79
        %p188 = pneg %p76
        %p189 = pneg %p107
        %p190 = pneg %p104
        %s191 = sand.u32 %s94, 1
        %s192 = scalar_lea.sflag [#allocation4], %s191
        %s193 = sand.u32 %s94, 1
        %s194 = smul.addr %s193, 8
        %s195 = scalar_lea.vmem [#allocation7], %s194
        %v196 = vld [vmem:[#allocation2] sm:$0xff]
        %v197 = vld [vmem:[%s175] sm:$0xff]
        %v198 = vld [vmem:[%s175 + $0x8] sm:$0xff]
        %v199 = vld [vmem:[%s175 + $0x10] sm:$0xff]
        %v200 = vld [vmem:[%s175 + $0x18] sm:$0xff]
        %v201 = vld [vmem:[%s175 + $0x20] sm:$0xff]
        %v202 = vld [vmem:[%s175 + $0x28] sm:$0xff]
        %v203 = vld [vmem:[%s175 + $0x30] sm:$0xff]
        %v204 = vld [vmem:[%s175 + $0x38] sm:$0xff]
        %vm205 = vcmask 523264
        %v207 = vsel %vm205, %v196, 0
        %209 = vmatprep.subr.mxu0 0.0
        %v210 = vand.u32 %v197, 4294901760
        %211 = vmatpush1.msra.mxu0 %v210
        %212 = vmatprep.subr.mxu0 0.0
        %v213 = vand.u32 %v198, 4294901760
        %214 = vmatpush1.msra.mxu0 %v213
        %215 = vmatprep.subr.mxu0 0.0
        %v216 = vand.u32 %v199, 4294901760
        %217 = vmatpush1.msra.mxu0 %v216
        %218 = vmatprep.subr.mxu0 0.0
        %v219 = vand.u32 %v200, 4294901760
        %220 = vmatpush1.msra.mxu0 %v219
        %221 = vmatprep.subr.mxu0 0.0
        %v222 = vand.u32 %v201, 4294901760
        %223 = vmatpush1.msra.mxu0 %v222
        %224 = vmatprep.subr.mxu0 0.0
        %v225 = vand.u32 %v202, 4294901760
        %226 = vmatpush1.msra.mxu0 %v225
        %227 = vmatprep.subr.mxu0 0.0
        %v228 = vand.u32 %v203, 4294901760
        %229 = vmatpush1.msra.mxu0 %v228
        %230 = vmatprep.subr.mxu0 0.0
        %v231 = vand.u32 %v204, 4294901760
        %232 = vmatpush1.msra.mxu0 %v231
        %233 = vmatprep.subr.mxu0 0.0
        %234 = vmatpush1.msra.mxu0 0.0
        %235 = vmatprep.subr.mxu0 0.0
        %236 = vmatpush1.msra.mxu0 0.0
        %237 = vmatprep.subr.mxu0 0.0
        %238 = vmatpush1.msra.mxu0 0.0
        %239 = vmatprep.subr.mxu0 0.0
        %240 = vmatpush1.msra.mxu0 0.0
        %241 = vmatprep.subr.mxu0 0.0
        %242 = vmatpush1.msra.mxu0 0.0
        %243 = vmatprep.subr.mxu0 0.0
        %244 = vmatpush1.msra.mxu0 0.0
        %245 = vmatprep.subr.mxu0 0.0
        %246 = vmatpush1.msra.mxu0 0.0
        %247 = vmatprep.subr.mxu0 0.0
        %248 = vmatpush1.msra.mxu0 0.0
        %249 = vmatprep.subr.mxu0 0.0
        %250 = vmatpush1.msra.mxu0 0.0
        %251 = vmatprep.subr.mxu0 0.0
        %252 = vmatpush1.msra.mxu0 0.0
        %253 = vmatprep.subr.mxu0 0.0
        %254 = vmatpush1.msra.mxu0 0.0
        %255 = vmatprep.subr.mxu0 0.0
        %256 = vmatpush1.msra.mxu0 0.0
        %257 = vmatprep.subr.mxu0 0.0
        %258 = vmatpush1.msra.mxu0 0.0
        %259 = vmatprep.subr.mxu0 0.0
        %260 = vmatpush1.msra.mxu0 0.0
        %261 = vmatprep.subr.mxu0 0.0
        %262 = vmatpush1.msra.mxu0 0.0
        %263 = vmatprep.subr.mxu0 0.0
        %264 = vmatpush1.msra.mxu0 0.0
        %265 = vmatprep.subr.mxu0 0.0
        %266 = vmatpush1.msra.mxu0 0.0
        %267 = vmatprep.subr.mxu0 0.0
        %268 = vmatpush1.msra.mxu0 0.0
        %269 = vmatprep.subr.mxu0 0.0
        %270 = vmatpush1.msra.mxu0 0.0
        %271 = vmatprep.subr.mxu0 0.0
        %272 = vmatpush1.msra.mxu0 0.0
        %273 = vmatprep.subr.mxu0 0.0
        %274 = vmatpush1.msra.mxu0 0.0
        %275 = vmatprep.subr.mxu0 0.0
        %276 = vmatpush1.msra.mxu0 0.0
        %277 = vmatprep.subr.mxu0 0.0
        %278 = vmatpush1.msra.mxu0 0.0
        %279 = vmatprep.subr.mxu0 0.0
        %280 = vmatpush1.msra.mxu0 0.0
        %281 = vmatprep.mubr.f32.mxu0 0.0
        %v282 = vand.u32 %v207, 4294901760
        %v283 = vsub.f32 %v207, %v282
        %v284 = vand.u32 %v283, 4294901760
        %v285 = vsub.f32 %v283, %v284
        %v286 = vand.u32 %v285, 4294901760
        %287 = vmatmul.mubr.f32.gmra.mrb[0].mxu0 %v286
        %v288 = vpop.f32.mrb[0].mxu0
        %v289 = vadd.f32 0.0, %v288
        %v290 = vpop.f32.mrb[0].mxu0
        %291 = vdwg.mxu0
        %292 = vmatprep.subr.mxu0 0.0
        %v293 = vand.u32 %v197, 4294901760
        %v294 = vsub.f32 %v197, %v293
        %v295 = vand.u32 %v294, 4294901760
        %v296 = vsub.f32 %v294, %v295
        %v297 = vand.u32 %v296, 4294901760
        %298 = vmatpush1.msra.mxu0 %v297
        %299 = vmatprep.subr.mxu0 0.0
        %v300 = vand.u32 %v198, 4294901760
        %v301 = vsub.f32 %v198, %v300
        %v302 = vand.u32 %v301, 4294901760
        %v303 = vsub.f32 %v301, %v302
        %v304 = vand.u32 %v303, 4294901760
        %305 = vmatpush1.msra.mxu0 %v304
        %306 = vmatprep.subr.mxu0 0.0
        %v307 = vand.u32 %v199, 4294901760
        %v308 = vsub.f32 %v199, %v307
        %v309 = vand.u32 %v308, 4294901760
        %v310 = vsub.f32 %v308, %v309
        %v311 = vand.u32 %v310, 4294901760
        %312 = vmatpush1.msra.mxu0 %v311
        %313 = vmatprep.subr.mxu0 0.0
        %v314 = vand.u32 %v200, 4294901760
        %v315 = vsub.f32 %v200, %v314
        %v316 = vand.u32 %v315, 4294901760
        %v317 = vsub.f32 %v315, %v316
        %v318 = vand.u32 %v317, 4294901760
        %319 = vmatpush1.msra.mxu0 %v318
        %320 = vmatprep.subr.mxu0 0.0
        %v321 = vand.u32 %v201, 4294901760
        %v322 = vsub.f32 %v201, %v321
        %v323 = vand.u32 %v322, 4294901760
        %v324 = vsub.f32 %v322, %v323
        %v325 = vand.u32 %v324, 4294901760
        %326 = vmatpush1.msra.mxu0 %v325
        %327 = vmatprep.subr.mxu0 0.0
        %v328 = vand.u32 %v202, 4294901760
        %v329 = vsub.f32 %v202, %v328
        %v330 = vand.u32 %v329, 4294901760
        %v331 = vsub.f32 %v329, %v330
        %v332 = vand.u32 %v331, 4294901760
        %333 = vmatpush1.msra.mxu0 %v332
        %334 = vmatprep.subr.mxu0 0.0
        %v335 = vand.u32 %v203, 4294901760
        %v336 = vsub.f32 %v203, %v335
        %v337 = vand.u32 %v336, 4294901760
        %v338 = vsub.f32 %v336, %v337
        %v339 = vand.u32 %v338, 4294901760
        %340 = vmatpush1.msra.mxu0 %v339
        %341 = vmatprep.subr.mxu0 0.0
        %v342 = vand.u32 %v204, 4294901760
        %v343 = vsub.f32 %v204, %v342
        %v344 = vand.u32 %v343, 4294901760
        %v345 = vsub.f32 %v343, %v344
        %v346 = vand.u32 %v345, 4294901760
        %347 = vmatpush1.msra.mxu0 %v346
        %348 = vmatprep.subr.mxu0 0.0
        %349 = vmatpush1.msra.mxu0 0.0
        %350 = vmatprep.subr.mxu0 0.0
        %351 = vmatpush1.msra.mxu0 0.0
        %352 = vmatprep.subr.mxu0 0.0
        %353 = vmatpush1.msra.mxu0 0.0
        %354 = vmatprep.subr.mxu0 0.0
        %355 = vmatpush1.msra.mxu0 0.0
        %356 = vmatprep.subr.mxu0 0.0
        %357 = vmatpush1.msra.mxu0 0.0
        %358 = vmatprep.subr.mxu0 0.0
        %359 = vmatpush1.msra.mxu0 0.0
        %360 = vmatprep.subr.mxu0 0.0
        %361 = vmatpush1.msra.mxu0 0.0
        %362 = vmatprep.subr.mxu0 0.0
        %363 = vmatpush1.msra.mxu0 0.0
        %364 = vmatprep.subr.mxu0 0.0
        %365 = vmatpush1.msra.mxu0 0.0
        %366 = vmatprep.subr.mxu0 0.0
        %367 = vmatpush1.msra.mxu0 0.0
        %368 = vmatprep.subr.mxu0 0.0
        %369 = vmatpush1.msra.mxu0 0.0
        %370 = vmatprep.subr.mxu0 0.0
        %371 = vmatpush1.msra.mxu0 0.0
        %372 = vmatprep.subr.mxu0 0.0
        %373 = vmatpush1.msra.mxu0 0.0
        %374 = vmatprep.subr.mxu0 0.0
        %375 = vmatpush1.msra.mxu0 0.0
        %376 = vmatprep.subr.mxu0 0.0
        %377 = vmatpush1.msra.mxu0 0.0
        %378 = vmatprep.subr.mxu0 0.0
        %379 = vmatpush1.msra.mxu0 0.0
        %380 = vmatprep.subr.mxu0 0.0
        %381 = vmatpush1.msra.mxu0 0.0
        %382 = vmatprep.subr.mxu0 0.0
        %383 = vmatpush1.msra.mxu0 0.0
        %384 = vmatprep.subr.mxu0 0.0
        %385 = vmatpush1.msra.mxu0 0.0
        %386 = vmatprep.subr.mxu0 0.0
        %387 = vmatpush1.msra.mxu0 0.0
        %388 = vmatprep.subr.mxu0 0.0
        %389 = vmatpush1.msra.mxu0 0.0
        %390 = vmatprep.subr.mxu0 0.0
        %391 = vmatpush1.msra.mxu0 0.0
        %392 = vmatprep.subr.mxu0 0.0
        %393 = vmatpush1.msra.mxu0 0.0
        %394 = vmatprep.subr.mxu0 0.0
        %395 = vmatpush1.msra.mxu0 0.0
        %396 = vmatprep.mubr.f32.mxu0 0.0
        %v397 = vand.u32 %v207, 4294901760
        %398 = vmatmul.mubr.f32.gmra.mrb[0].mxu0 %v397
        %v399 = vpop.f32.mrb[0].mxu0
        %v400 = vadd.f32 %v289, %v399
        %v401 = vpop.f32.mrb[0].mxu0
        %402 = vdwg.mxu0
        %403 = vmatprep.subr.mxu0 0.0
        %v404 = vand.u32 %v197, 4294901760
        %v405 = vsub.f32 %v197, %v404
        %406 = vmatpush1.msra.mxu0 %v405
        %407 = vmatprep.subr.mxu0 0.0
        %v408 = vand.u32 %v198, 4294901760
        %v409 = vsub.f32 %v198, %v408
        %410 = vmatpush1.msra.mxu0 %v409
        %411 = vmatprep.subr.mxu0 0.0
        %v412 = vand.u32 %v199, 4294901760
        %v413 = vsub.f32 %v199, %v412
        %414 = vmatpush1.msra.mxu0 %v413
        %415 = vmatprep.subr.mxu0 0.0
        %v416 = vand.u32 %v200, 4294901760
        %v417 = vsub.f32 %v200, %v416
        %418 = vmatpush1.msra.mxu0 %v417
        %419 = vmatprep.subr.mxu0 0.0
        %v420 = vand.u32 %v201, 4294901760
        %v421 = vsub.f32 %v201, %v420
        %422 = vmatpush1.msra.mxu0 %v421
        %423 = vmatprep.subr.mxu0 0.0
        %v424 = vand.u32 %v202, 4294901760
        %v425 = vsub.f32 %v202, %v424
        %426 = vmatpush1.msra.mxu0 %v425
        %427 = vmatprep.subr.mxu0 0.0
        %v428 = vand.u32 %v203, 4294901760
        %v429 = vsub.f32 %v203, %v428
        %430 = vmatpush1.msra.mxu0 %v429
        %431 = vmatprep.subr.mxu0 0.0
        %v432 = vand.u32 %v204, 4294901760
        %v433 = vsub.f32 %v204, %v432
        %434 = vmatpush1.msra.mxu0 %v433
        %435 = vmatprep.subr.mxu0 0.0
        %436 = vmatpush1.msra.mxu0 0.0
        %437 = vmatprep.subr.mxu0 0.0
        %438 = vmatpush1.msra.mxu0 0.0
        %439 = vmatprep.subr.mxu0 0.0
        %440 = vmatpush1.msra.mxu0 0.0
        %441 = vmatprep.subr.mxu0 0.0
        %442 = vmatpush1.msra.mxu0 0.0
        %443 = vmatprep.subr.mxu0 0.0
        %444 = vmatpush1.msra.mxu0 0.0
        %445 = vmatprep.subr.mxu0 0.0
        %446 = vmatpush1.msra.mxu0 0.0
        %447 = vmatprep.subr.mxu0 0.0
        %448 = vmatpush1.msra.mxu0 0.0
        %449 = vmatprep.subr.mxu0 0.0
        %450 = vmatpush1.msra.mxu0 0.0
        %451 = vmatprep.subr.mxu0 0.0
        %452 = vmatpush1.msra.mxu0 0.0
        %453 = vmatprep.subr.mxu0 0.0
        %454 = vmatpush1.msra.mxu0 0.0
        %455 = vmatprep.subr.mxu0 0.0
        %456 = vmatpush1.msra.mxu0 0.0
        %457 = vmatprep.subr.mxu0 0.0
        %458 = vmatpush1.msra.mxu0 0.0
        %459 = vmatprep.subr.mxu0 0.0
        %460 = vmatpush1.msra.mxu0 0.0
        %461 = vmatprep.subr.mxu0 0.0
        %462 = vmatpush1.msra.mxu0 0.0
        %463 = vmatprep.subr.mxu0 0.0
        %464 = vmatpush1.msra.mxu0 0.0
        %465 = vmatprep.subr.mxu0 0.0
        %466 = vmatpush1.msra.mxu0 0.0
        %467 = vmatprep.subr.mxu0 0.0
        %468 = vmatpush1.msra.mxu0 0.0
        %469 = vmatprep.subr.mxu0 0.0
        %470 = vmatpush1.msra.mxu0 0.0
        %471 = vmatprep.subr.mxu0 0.0
        %472 = vmatpush1.msra.mxu0 0.0
        %473 = vmatprep.subr.mxu0 0.0
        %474 = vmatpush1.msra.mxu0 0.0
        %475 = vmatprep.subr.mxu0 0.0
        %476 = vmatpush1.msra.mxu0 0.0
        %477 = vmatprep.subr.mxu0 0.0
        %478 = vmatpush1.msra.mxu0 0.0
        %479 = vmatprep.subr.mxu0 0.0
        %480 = vmatpush1.msra.mxu0 0.0
        %481 = vmatprep.subr.mxu0 0.0
        %482 = vmatpush1.msra.mxu0 0.0
        %483 = vmatprep.mubr.f32.mxu0 0.0
        %v484 = vand.u32 %v207, 4294901760
        %v485 = vsub.f32 %v207, %v484
        %486 = vmatmul.mubr.f32.gmra.mrb[0].mxu0 %v485
        %v487 = vpop.f32.mrb[0].mxu0
        %v488 = vadd.f32 %v400, %v487
        %v489 = vpop.f32.mrb[0].mxu0
        %490 = vdwg.mxu0
        %491 = vmatprep.subr.mxu0 0.0
        %v492 = vand.u32 %v197, 4294901760
        %493 = vmatpush1.msra.mxu0 %v492
        %494 = vmatprep.subr.mxu0 0.0
        %v495 = vand.u32 %v198, 4294901760
        %496 = vmatpush1.msra.mxu0 %v495
        %497 = vmatprep.subr.mxu0 0.0
        %v498 = vand.u32 %v199, 4294901760
        %499 = vmatpush1.msra.mxu0 %v498
        %500 = vmatprep.subr.mxu0 0.0
        %v501 = vand.u32 %v200, 4294901760
        %502 = vmatpush1.msra.mxu0 %v501
        %503 = vmatprep.subr.mxu0 0.0
        %v504 = vand.u32 %v201, 4294901760
        %505 = vmatpush1.msra.mxu0 %v504
        %506 = vmatprep.subr.mxu0 0.0
        %v507 = vand.u32 %v202, 4294901760
        %508 = vmatpush1.msra.mxu0 %v507
        %509 = vmatprep.subr.mxu0 0.0
        %v510 = vand.u32 %v203, 4294901760
        %511 = vmatpush1.msra.mxu0 %v510
        %512 = vmatprep.subr.mxu0 0.0
        %v513 = vand.u32 %v204, 4294901760
        %514 = vmatpush1.msra.mxu0 %v513
        %515 = vmatprep.subr.mxu0 0.0
        %516 = vmatpush1.msra.mxu0 0.0
        %517 = vmatprep.subr.mxu0 0.0
        %518 = vmatpush1.msra.mxu0 0.0
        %519 = vmatprep.subr.mxu0 0.0
        %520 = vmatpush1.msra.mxu0 0.0
        %521 = vmatprep.subr.mxu0 0.0
        %522 = vmatpush1.msra.mxu0 0.0
        %523 = vmatprep.subr.mxu0 0.0
        %524 = vmatpush1.msra.mxu0 0.0
        %525 = vmatprep.subr.mxu0 0.0
        %526 = vmatpush1.msra.mxu0 0.0
        %527 = vmatprep.subr.mxu0 0.0
        %528 = vmatpush1.msra.mxu0 0.0
        %529 = vmatprep.subr.mxu0 0.0
        %530 = vmatpush1.msra.mxu0 0.0
        %531 = vmatprep.subr.mxu0 0.0
        %532 = vmatpush1.msra.mxu0 0.0
        %533 = vmatprep.subr.mxu0 0.0
        %534 = vmatpush1.msra.mxu0 0.0
        %535 = vmatprep.subr.mxu0 0.0
        %536 = vmatpush1.msra.mxu0 0.0
        %537 = vmatprep.subr.mxu0 0.0
        %538 = vmatpush1.msra.mxu0 0.0
        %539 = vmatprep.subr.mxu0 0.0
        %540 = vmatpush1.msra.mxu0 0.0
        %541 = vmatprep.subr.mxu0 0.0
        %542 = vmatpush1.msra.mxu0 0.0
        %543 = vmatprep.subr.mxu0 0.0
        %544 = vmatpush1.msra.mxu0 0.0
        %545 = vmatprep.subr.mxu0 0.0
        %546 = vmatpush1.msra.mxu0 0.0
        %547 = vmatprep.subr.mxu0 0.0
        %548 = vmatpush1.msra.mxu0 0.0
        %549 = vmatprep.subr.mxu0 0.0
        %550 = vmatpush1.msra.mxu0 0.0
        %551 = vmatprep.subr.mxu0 0.0
        %552 = vmatpush1.msra.mxu0 0.0
        %553 = vmatprep.subr.mxu0 0.0
        %554 = vmatpush1.msra.mxu0 0.0
        %555 = vmatprep.subr.mxu0 0.0
        %556 = vmatpush1.msra.mxu0 0.0
        %557 = vmatprep.subr.mxu0 0.0
        %558 = vmatpush1.msra.mxu0 0.0
        %559 = vmatprep.subr.mxu0 0.0
        %560 = vmatpush1.msra.mxu0 0.0
        %561 = vmatprep.subr.mxu0 0.0
        %562 = vmatpush1.msra.mxu0 0.0
        %563 = vmatprep.mubr.f32.mxu0 0.0
        %v564 = vand.u32 %v207, 4294901760
        %v565 = vsub.f32 %v207, %v564
        %v566 = vand.u32 %v565, 4294901760
        %567 = vmatmul.mubr.f32.gmra.mrb[0].mxu0 %v566
        %v568 = vpop.f32.mrb[0].mxu0
        %v569 = vadd.f32 %v488, %v568
        %v570 = vpop.f32.mrb[0].mxu0
        %571 = vdwg.mxu0
        %572 = vmatprep.subr.mxu0 0.0
        %v573 = vand.u32 %v197, 4294901760
        %v574 = vsub.f32 %v197, %v573
        %v575 = vand.u32 %v574, 4294901760
        %576 = vmatpush1.msra.mxu0 %v575
        %577 = vmatprep.subr.mxu0 0.0
        %v578 = vand.u32 %v198, 4294901760
        %v579 = vsub.f32 %v198, %v578
        %v580 = vand.u32 %v579, 4294901760
        %581 = vmatpush1.msra.mxu0 %v580
        %582 = vmatprep.subr.mxu0 0.0
        %v583 = vand.u32 %v199, 4294901760
        %v584 = vsub.f32 %v199, %v583
        %v585 = vand.u32 %v584, 4294901760
        %586 = vmatpush1.msra.mxu0 %v585
        %587 = vmatprep.subr.mxu0 0.0
        %v588 = vand.u32 %v200, 4294901760
        %v589 = vsub.f32 %v200, %v588
        %v590 = vand.u32 %v589, 4294901760
        %591 = vmatpush1.msra.mxu0 %v590
        %592 = vmatprep.subr.mxu0 0.0
        %v593 = vand.u32 %v201, 4294901760
        %v594 = vsub.f32 %v201, %v593
        %v595 = vand.u32 %v594, 4294901760
        %596 = vmatpush1.msra.mxu0 %v595
        %597 = vmatprep.subr.mxu0 0.0
        %v598 = vand.u32 %v202, 4294901760
        %v599 = vsub.f32 %v202, %v598
        %v600 = vand.u32 %v599, 4294901760
        %601 = vmatpush1.msra.mxu0 %v600
        %602 = vmatprep.subr.mxu0 0.0
        %v603 = vand.u32 %v203, 4294901760
        %v604 = vsub.f32 %v203, %v603
        %v605 = vand.u32 %v604, 4294901760
        %606 = vmatpush1.msra.mxu0 %v605
        %607 = vmatprep.subr.mxu0 0.0
        %v608 = vand.u32 %v204, 4294901760
        %v609 = vsub.f32 %v204, %v608
        %v610 = vand.u32 %v609, 4294901760
        %611 = vmatpush1.msra.mxu0 %v610
        %612 = vmatprep.subr.mxu0 0.0
        %613 = vmatpush1.msra.mxu0 0.0
        %614 = vmatprep.subr.mxu0 0.0
        %615 = vmatpush1.msra.mxu0 0.0
        %616 = vmatprep.subr.mxu0 0.0
        %617 = vmatpush1.msra.mxu0 0.0
        %618 = vmatprep.subr.mxu0 0.0
        %619 = vmatpush1.msra.mxu0 0.0
        %620 = vmatprep.subr.mxu0 0.0
        %621 = vmatpush1.msra.mxu0 0.0
        %622 = vmatprep.subr.mxu0 0.0
        %623 = vmatpush1.msra.mxu0 0.0
        %624 = vmatprep.subr.mxu0 0.0
        %625 = vmatpush1.msra.mxu0 0.0
        %626 = vmatprep.subr.mxu0 0.0
        %627 = vmatpush1.msra.mxu0 0.0
        %628 = vmatprep.subr.mxu0 0.0
        %629 = vmatpush1.msra.mxu0 0.0
        %630 = vmatprep.subr.mxu0 0.0
        %631 = vmatpush1.msra.mxu0 0.0
        %632 = vmatprep.subr.mxu0 0.0
        %633 = vmatpush1.msra.mxu0 0.0
        %634 = vmatprep.subr.mxu0 0.0
        %635 = vmatpush1.msra.mxu0 0.0
        %636 = vmatprep.subr.mxu0 0.0
        %637 = vmatpush1.msra.mxu0 0.0
        %638 = vmatprep.subr.mxu0 0.0
        %639 = vmatpush1.msra.mxu0 0.0
        %640 = vmatprep.subr.mxu0 0.0
        %641 = vmatpush1.msra.mxu0 0.0
        %642 = vmatprep.subr.mxu0 0.0
        %643 = vmatpush1.msra.mxu0 0.0
        %644 = vmatprep.subr.mxu0 0.0
        %645 = vmatpush1.msra.mxu0 0.0
        %646 = vmatprep.subr.mxu0 0.0
        %647 = vmatpush1.msra.mxu0 0.0
        %648 = vmatprep.subr.mxu0 0.0
        %649 = vmatpush1.msra.mxu0 0.0
        %650 = vmatprep.subr.mxu0 0.0
        %651 = vmatpush1.msra.mxu0 0.0
        %652 = vmatprep.subr.mxu0 0.0
        %653 = vmatpush1.msra.mxu0 0.0
        %654 = vmatprep.subr.mxu0 0.0
        %655 = vmatpush1.msra.mxu0 0.0
        %656 = vmatprep.subr.mxu0 0.0
        %657 = vmatpush1.msra.mxu0 0.0
        %658 = vmatprep.subr.mxu0 0.0
        %659 = vmatpush1.msra.mxu0 0.0
        %660 = vmatprep.mubr.f32.mxu0 0.0
        %v661 = vand.u32 %v207, 4294901760
        %662 = vmatmul.mubr.f32.gmra.mrb[0].mxu0 %v661
        %v663 = vpop.f32.mrb[0].mxu0
        %v664 = vadd.f32 %v569, %v663
        %v665 = vpop.f32.mrb[0].mxu0
        %666 = vdwg.mxu0
        %667 = vmatprep.subr.mxu0 0.0
        %v668 = vand.u32 %v197, 4294901760
        %669 = vmatpush1.msra.mxu0 %v668
        %670 = vmatprep.subr.mxu0 0.0
        %v671 = vand.u32 %v198, 4294901760
        %672 = vmatpush1.msra.mxu0 %v671
        %673 = vmatprep.subr.mxu0 0.0
        %v674 = vand.u32 %v199, 4294901760
        %675 = vmatpush1.msra.mxu0 %v674
        %676 = vmatprep.subr.mxu0 0.0
        %v677 = vand.u32 %v200, 4294901760
        %678 = vmatpush1.msra.mxu0 %v677
        %679 = vmatprep.subr.mxu0 0.0
        %v680 = vand.u32 %v201, 4294901760
        %681 = vmatpush1.msra.mxu0 %v680
        %682 = vmatprep.subr.mxu0 0.0
        %v683 = vand.u32 %v202, 4294901760
        %684 = vmatpush1.msra.mxu0 %v683
        %685 = vmatprep.subr.mxu0 0.0
        %v686 = vand.u32 %v203, 4294901760
        %687 = vmatpush1.msra.mxu0 %v686
        %688 = vmatprep.subr.mxu0 0.0
        %v689 = vand.u32 %v204, 4294901760
        %690 = vmatpush1.msra.mxu0 %v689
        %691 = vmatprep.subr.mxu0 0.0
        %692 = vmatpush1.msra.mxu0 0.0
        %693 = vmatprep.subr.mxu0 0.0
        %694 = vmatpush1.msra.mxu0 0.0
        %695 = vmatprep.subr.mxu0 0.0
        %696 = vmatpush1.msra.mxu0 0.0
        %697 = vmatprep.subr.mxu0 0.0
        %698 = vmatpush1.msra.mxu0 0.0
        %699 = vmatprep.subr.mxu0 0.0
        %700 = vmatpush1.msra.mxu0 0.0
        %701 = vmatprep.subr.mxu0 0.0
        %702 = vmatpush1.msra.mxu0 0.0
        %703 = vmatprep.subr.mxu0 0.0
        %704 = vmatpush1.msra.mxu0 0.0
        %705 = vmatprep.subr.mxu0 0.0
        %706 = vmatpush1.msra.mxu0 0.0
        %707 = vmatprep.subr.mxu0 0.0
        %708 = vmatpush1.msra.mxu0 0.0
        %709 = vmatprep.subr.mxu0 0.0
        %710 = vmatpush1.msra.mxu0 0.0
        %711 = vmatprep.subr.mxu0 0.0
        %712 = vmatpush1.msra.mxu0 0.0
        %713 = vmatprep.subr.mxu0 0.0
        %714 = vmatpush1.msra.mxu0 0.0
        %715 = vmatprep.subr.mxu0 0.0
        %716 = vmatpush1.msra.mxu0 0.0
        %717 = vmatprep.subr.mxu0 0.0
        %718 = vmatpush1.msra.mxu0 0.0
        %719 = vmatprep.subr.mxu0 0.0
        %720 = vmatpush1.msra.mxu0 0.0
        %721 = vmatprep.subr.mxu0 0.0
        %722 = vmatpush1.msra.mxu0 0.0
        %723 = vmatprep.subr.mxu0 0.0
        %724 = vmatpush1.msra.mxu0 0.0
        %725 = vmatprep.subr.mxu0 0.0
        %726 = vmatpush1.msra.mxu0 0.0
        %727 = vmatprep.subr.mxu0 0.0
        %728 = vmatpush1.msra.mxu0 0.0
        %729 = vmatprep.subr.mxu0 0.0
        %730 = vmatpush1.msra.mxu0 0.0
        %731 = vmatprep.subr.mxu0 0.0
        %732 = vmatpush1.msra.mxu0 0.0
        %733 = vmatprep.subr.mxu0 0.0
        %734 = vmatpush1.msra.mxu0 0.0
        %735 = vmatprep.subr.mxu0 0.0
        %736 = vmatpush1.msra.mxu0 0.0
        %737 = vmatprep.subr.mxu0 0.0
        %738 = vmatpush1.msra.mxu0 0.0
        %739 = vmatprep.mubr.f32.mxu0 0.0
        %v740 = vand.u32 %v207, 4294901760
        %741 = vmatmul.mubr.f32.gmra.mrb[0].mxu0 %v740
        %v742 = vpop.f32.mrb[0].mxu0
        %v743 = vadd.f32 %v664, %v742
        %v744 = vpop.f32.mrb[0].mxu0
        %745 = vdwg.mxu0
        %v746 = vsel %vm205, %v743, 0.0
        %747 = vadd.xlane.f32.xlu0 %v746
        %v748 = vpop.xlane.xlu0 %747
        %v749 = vmul.f32 %v748, 0.015625
        %v750 = vsub.f32 %v743, %v749
        %v751 = vmul.f32 %v750, %v750
        %v752 = vsel %vm205, %v751, 0.0
        %753 = vadd.xlane.f32.xlu0 %v752
        %v754 = vpop.xlane.xlu0 %753
        %v755 = vmul.f32 %v754, 0.015625
        %v756 = vadd.f32 %v755, 1e-05
        %v757 = vrsqrt.pop %v756
        %v758 = vmul.f32 %v750, %v757
        %vm759 = vcmp.ge.f32.partialorder %v758, 0.0
        %v760 = vmul.f32 %v758, 0.0
        %v761 = vsel %vm759, %v758, %v760
        %762 = vst.msk [vmem:[%s195] sm:$0xff] %vm205, %v761
        %s763 = sand.u32 %s94, 1
        %s764 = scalar_lea.sflag [#allocation4], %s763
        %s765 = sand.u32 %s94, 1
        %s766 = smul.addr %s765, 8
        %s767 = scalar_lea.vmem [#allocation7], %s766
        // Predicated region
        $region37: #{tpu_custom_call.1} parent=27 // pred_check
          %p768 = pneg %p104
        $region38: #{tpu_custom_call.1} parent=27 // pred_check_branch
          %770 = sbr.rel (%p768) target = $region40
        $region39: #{tpu_custom_call.1} parent=27 // pred_region
          %s772 = ssub.s32 128, 128
          %773 = vsyncadd %s764, %s772
          %s774 = sadd.s32 %s25, %s24
          %s775 = smul.addr %s774, 128
          %s776 = scalar_lea.hbm %s2, %s775
          %s778 = sshll.u32 %s767, 4
          %s779 = int_to_ptr.vmem [resolvable:$true] %s778
          %781 = dma.vmem_to_hbm [thread:$0]  %s779, 128, %s776, %s764
        $region40: #{tpu_custom_call.1} parent=27 // pred_fallthru
          _
      $region28: #{tpu_custom_call.1} parent=5 // pred_fallthru
        _
      %p782 = scmp.le.s32.totalorder 2, %s15
      // Predicated region
      $region41: #{tpu_custom_call.1} parent=5 // pred_check
        %p783 = pneg %p782
      $region42: #{tpu_custom_call.1} parent=5 // pred_check_branch
        %785 = sbr.rel (%p783) target = $region44
      $region43: #{tpu_custom_call.1} parent=5 // pred_region
        %s786 = ssub.s32 %s15, 2
        // Predicated region
        $region45: #{tpu_custom_call.1} parent=43 // pred_check
          %p787 = pneg %p110
        $region46: #{tpu_custom_call.1} parent=43 // pred_check_branch
          %789 = sbr.rel (%p787) target = $region48
        $region47: #{tpu_custom_call.1} parent=43 // pred_region
          %s790 = sand.u32 %s95, 1
          %s791 = scalar_lea.sflag [#allocation4], %s790
          %s792 = sand.u32 %s95, 1
          %s793 = smul.addr %s792, 8
          %s794 = scalar_lea.vmem [#allocation7], %s793
          %795 = dma.done %s791, 128
        $region48: #{tpu_custom_call.1} parent=43 // pred_fallthru
          _
      $region44: #{tpu_custom_call.1} parent=5 // pred_fallthru
        _
    $region6: #{tpu_custom_call.1} parent=1 // loop_footer
      %s19 = sadd.s32 1, %s15
    $region7: #{tpu_custom_call.1} parent=1 // loop_footer_branch
      %14 = sbr.rel target = $region3
    $region8: #{tpu_custom_call.1} parent=1 // loop_exit
      _
    %796 = vsyncpa [#allocation3], 1
    %s797 = scalar_lea.sflag [#allocation3], 1
    %798 = vsyncpa %s797, 1
    %799 = vsyncpa [#allocation6], 1
    %s800 = scalar_lea.sflag [#allocation6], 1
    %801 = vsyncpa %s800, 1
    %802 = vsyncpa [#allocation4], 1
    %s803 = scalar_lea.sflag [#allocation4], 1
    %804 = vsyncpa %s803, 1

</llo_original>
